<compile_context>
chip_gen: v7x
topology: tpu7x:2x2x1
jax: 0.10.0
libtpu: 0.0.40
codegen_flags: <defaults>
</compile_context>

<pallas_src>
import jax
import jax.numpy as jnp
from jax import lax
from jax.experimental import pallas as pl
from jax.experimental.pallas import tpu as pltpu


def _round_up(x, m):
    return ((x + m - 1) // m) * m


def _vmem_budget_bytes():
    """Explicit per-generation scoped-VMEM budget (review item #3).

    v7x has 64 MiB physical VMEM, v5e/v6e have 128 MiB; the scoped *defaults*
    are only 16/32 MiB. We raise the limit explicitly but keep ~25% headroom
    for compiler-internal scratch, giving 48 MiB on v7x and 96 MiB on v5e/v6e.
    """
    cap = 64 * 1024 * 1024  # conservative fallback = smallest current gen (v7x)
    try:
        info = pltpu.get_tpu_info()
        cap = int(getattr(info, "vmem_capacity_bytes", cap))
    except Exception:
        pass
    return (cap * 3) // 4


# Whole-array, non-pipelined operand specs (single resident copy, no
# double-buffering -- used for the loop-invariant tables / weight).
_VMEM_SPEC = pl.BlockSpec(memory_space=pltpu.MemorySpace.VMEM)
_SMEM_SPEC = pl.BlockSpec(memory_space=pltpu.MemorySpace.SMEM)
_HBM_SPEC = pl.BlockSpec(memory_space=pl.ANY)


# ----------------------------------------------------------------------------
# Path A: small vocab -- VMEM-resident tables, one-hot gather on the MXU.
# ----------------------------------------------------------------------------
def _gmf_onehot_kernel(u_idx_ref, i_idx_ref,   # (1, TB) int32 index tiles (VMEM, pipelined)
                       u_tab_ref, i_tab_ref,   # (F, U) / (F, I) tables (VMEM, resident once)
                       w_ref,                  # (F, 1) f32 linear weight (VMEM, resident once)
                       b_ref,                  # (1,)   f32 bias (SMEM)
                       o_ref):                 # (1, TB) f32 lane-dense output tile
    _, num_u = u_tab_ref.shape
    _, num_i = i_tab_ref.shape
    tb = u_idx_ref.shape[-1]
    tab_dt = u_tab_ref.dtype

    u_idx = u_idx_ref[...]                                     # (1, TB)
    i_idx = i_idx_ref[...]                                     # (1, TB)

    # Batched gather as one-hot @ table on the MXU. The one-hot is built in the
    # table dtype (0/1 are exact in bf16), so the bf16 option halves both the
    # one-hot vreg footprint and hits the fast bf16 MXU path on v6e/v7x.
    u_rows = lax.broadcasted_iota(jnp.int32, (num_u, tb), 0)   # (U, TB)
    i_rows = lax.broadcasted_iota(jnp.int32, (num_i, tb), 0)   # (I, TB)
    u_onehot = (u_rows == u_idx).astype(tab_dt)                # (U, TB)
    i_onehot = (i_rows == i_idx).astype(tab_dt)                # (I, TB)

    u_emb = jnp.dot(u_tab_ref[...], u_onehot,
                    preferred_element_type=jnp.float32)        # (F, TB)
    i_emb = jnp.dot(i_tab_ref[...], i_onehot,
                    preferred_element_type=jnp.float32)        # (F, TB)

    # Elementwise math stays in f32 on every generation (v5e VPU has no bf16).
    weighted = u_emb * i_emb * w_ref[...]                      # (F, TB)
    logits = jnp.sum(weighted, axis=0, keepdims=True) + b_ref[0]
    o_ref[...] = jax.nn.sigmoid(logits).astype(o_ref.dtype)    # lane-dense store


def _forward_onehot(u_idx, i_idx, params, B, tb, n_tiles):
    u_tab = params["user_table"]      # (F, U) feature-major (prepared once)
    i_tab = params["item_table"]      # (F, I)
    w_col = params["weight"]          # (F, 1) f32
    b_vec = params["bias"]            # (1,)   f32
    f_dim, _ = u_tab.shape

    u_idx2 = u_idx.reshape(n_tiles, tb)
    i_idx2 = i_idx.reshape(n_tiles, tb)

    out = pl.pallas_call(
        _gmf_onehot_kernel,
        out_shape=jax.ShapeDtypeStruct((n_tiles, tb), jnp.float32),
        grid=(n_tiles,),
        in_specs=[
            pl.BlockSpec((1, tb), lambda t: (t, 0)),   # user index tile (pipelined)
            pl.BlockSpec((1, tb), lambda t: (t, 0)),   # item index tile (pipelined)
            _VMEM_SPEC,                                # user table: resident, single copy
            _VMEM_SPEC,                                # item table: resident, single copy
            _VMEM_SPEC,                                # linear weight: resident, single copy
            _SMEM_SPEC,                                # bias scalar
        ],
        out_specs=pl.BlockSpec((1, tb), lambda t: (t, 0)),
        compiler_params=pltpu.CompilerParams(
            # "parallel" lets a 2-TC chip (v7x) shard the >=2 batch tiles.
            dimension_semantics=("parallel",),
            vmem_limit_bytes=params["vmem_limit_bytes"],
        ),
    )(u_idx2, i_idx2, u_tab, i_tab, w_col, b_vec)
    return out.reshape(n_tiles * tb, 1)[:B]


# ----------------------------------------------------------------------------
# Path B: large vocab -- tables stay in HBM, per-row DMA gather driven by
# scalar-prefetched indices (PrefetchScalarGridSpec).
# ----------------------------------------------------------------------------
def _gmf_gather_kernel(u_idx_ref, i_idx_ref,   # (B_pad,) int32 in SMEM (scalar prefetch)
                       u_tab_hbm, i_tab_hbm,   # (U, F) / (I, F) f32 in HBM (pl.ANY)
                       w_ref,                  # (1, F) f32 (VMEM, resident once)
                       b_ref,                  # (1,)   f32 (SMEM)
                       o_ref,                  # (TB, 1) f32 output tile
                       u_buf, i_buf,           # (TB, F) f32 VMEM gather buffers
                       u_sem, i_sem):          # DMA semaphores
    tb, _ = u_buf.shape
    base = pl.program_id(0) * tb

    # Fan out all row DMAs (latencies overlap), then drain. All copies on one
    # semaphore are the same size, so waiting with a same-shaped dummy
    # descriptor per row is well-defined.
    def issue(j, carry):
        pltpu.make_async_copy(u_tab_hbm.at[u_idx_ref[base + j]],
                              u_buf.at[j], u_sem).start()
        pltpu.make_async_copy(i_tab_hbm.at[i_idx_ref[base + j]],
                              i_buf.at[j], i_sem).start()
        return carry
    lax.fori_loop(0, tb, issue, 0)

    def drain(j, carry):
        pltpu.make_async_copy(u_tab_hbm.at[0], u_buf.at[0], u_sem).wait()
        pltpu.make_async_copy(i_tab_hbm.at[0], i_buf.at[0], i_sem).wait()
        return carry
    lax.fori_loop(0, tb, drain, 0)

    weighted = u_buf[...] * i_buf[...] * w_ref[...]            # (TB, F) f32
    logits = jnp.sum(weighted, axis=-1, keepdims=True) + b_ref[0]
    # Output is only B floats total, so the narrow (TB,1) store is negligible
    # next to the gather traffic.
    o_ref[...] = jax.nn.sigmoid(logits).astype(o_ref.dtype)
    # TODO(synk): chunk/pipeline the row-DMA issue (and chunk the SMEM index
    # prefetch) for very large TB / very large B instead of issue-all/drain-all.


def _forward_gather(u_idx, i_idx, params, B, tb, n_tiles):
    u_tab = params["user_table"]      # (U, F) row-major, stays in HBM
    i_tab = params["item_table"]      # (I, F)
    w_row = params["weight"]          # (1, F) f32
    b_vec = params["bias"]            # (1,)   f32
    _, f_dim = u_tab.shape

    grid_spec = pltpu.PrefetchScalarGridSpec(
        num_scalar_prefetch=2,        # u_idx, i_idx land in SMEM before the grid
        grid=(n_tiles,),
        in_specs=[
            _HBM_SPEC,                # user table: no auto-DMA
            _HBM_SPEC,                # item table: no auto-DMA
            _VMEM_SPEC,               # weight: resident once
            _SMEM_SPEC,               # bias scalar
        ],
        out_specs=pl.BlockSpec((tb, 1), lambda t, u_sref, i_sref: (t, 0)),
        scratch_shapes=[
            pltpu.VMEM((tb, f_dim), jnp.float32),
            pltpu.VMEM((tb, f_dim), jnp.float32),
            pltpu.SemaphoreType.DMA,
            pltpu.SemaphoreType.DMA,
        ],
    )
    out = pl.pallas_call(
        _gmf_gather_kernel,
        out_shape=jax.ShapeDtypeStruct((n_tiles * tb, 1), jnp.float32),
        grid_spec=grid_spec,
        compiler_params=pltpu.CompilerParams(
            dimension_semantics=("arbitrary",),
            vmem_limit_bytes=params["vmem_limit_bytes"],
        ),
    )(u_idx, i_idx, u_tab, i_tab, w_row, b_vec)
    return out[:B]


# ----------------------------------------------------------------------------
# Parameter preparation (one-time, outside the hot path) + forward dispatch.
# ----------------------------------------------------------------------------
def gmf_prepare_params(user_table, item_table, weight, bias, *,
                       onehot_max_vocab=4096,
                       gather_dtype=jnp.float32,
                       block_b=None,
                       vmem_limit_bytes=None):
    """Chooses the gather strategy and converts layouts ONCE (no per-call work).

    user_table: (U, F), item_table: (I, F)  -- nn.Embedding weights
    weight: (1, F), bias: (1,)              -- nn.Linear(F, 1) params
    gather_dtype: f32 (exact) or bf16 (fast MXU path on v6e/v7x, ~1e-3 error)
    """
    U, F = user_table.shape
    I, Fi = item_table.shape
    assert F == Fi, "embedding dims must match"

    budget = int(vmem_limit_bytes) if vmem_limit_bytes else _vmem_budget_bytes()
    if block_b is None:
        # 128-MiB-VMEM parts (v5e/v6e) amortise per-step overhead with bigger
        # tiles; keep 64-MiB v7x at 512.
        block_b = 1024 if budget >= 80 * 1024 * 1024 else 512
    block_b = max(128, _round_up(block_b, 128))

    # VMEM estimate for the one-hot path at tile width block_b:
    # resident tables + iota/one-hot temporaries + f32 embedding temporaries
    # + double-buffered index/output tiles.
    dsize = jnp.dtype(gather_dtype).itemsize
    est = ((U + I) * F * dsize
           + (U + I) * block_b * (4 + dsize)
           + 3 * F * block_b * 4
           + 6 * block_b * 4)
    use_onehot = (U + I) <= onehot_max_vocab and est <= budget // 2

    if use_onehot:
        params = dict(
            mode="onehot",
            # Feature-major layout so the batch sits on lanes end-to-end and
            # the output tile is lane-dense. Transposed here, once.
            user_table=jnp.asarray(user_table, gather_dtype).T,   # (F, U)
            item_table=jnp.asarray(item_table, gather_dtype).T,   # (F, I)
            weight=jnp.asarray(weight, jnp.float32).reshape(F, 1),
        )
    else:
        params = dict(
            mode="gather",
            # Row-major (as given): each gathered row is a contiguous F*4-byte DMA.
            user_table=jnp.asarray(user_table, jnp.float32),      # (U, F)
            item_table=jnp.asarray(item_table, jnp.float32),      # (I, F)
            weight=jnp.asarray(weight, jnp.float32).reshape(1, F),
        )
    params.update(
        bias=jnp.asarray(bias, jnp.float32).reshape(1),
        num_users=U, num_items=I, factor_num=F,
        block_b=block_b, vmem_limit_bytes=budget,
    )
    return params


def gmf_forward(user_indices, item_indices, params, *, block_b=None):
    """GMF forward: returns (B, 1) f32 = sigmoid((E_u[u] * E_i[i]) @ W.T + b)."""
    mode = params["mode"]
    B = int(user_indices.shape[0])
    block_b = block_b or params["block_b"]
    assert block_b % 128 == 0 and block_b >= 128
    if mode == "gather":
        block_b = min(block_b, 512)   # bound outstanding row-DMAs per grid step

    # Batch tile: multiple of 128; >=2 tiles when B > 128 so both TensorCores
    # on a 2-TC chip (v7x) get work. Harmless extra tiny step on v5e/v6e.
    if B <= 128:
        tb = 128
    else:
        tb = min(block_b, _round_up(-(-B // 2), 128))
    b_pad = _round_up(B, tb)
    n_tiles = b_pad // tb
    pad = b_pad - B

    u_idx = jnp.pad(jnp.asarray(user_indices, jnp.int32), (0, pad))
    i_idx = jnp.pad(jnp.asarray(item_indices, jnp.int32), (0, pad))

    if mode == "onehot":
        return _forward_onehot(u_idx, i_idx, params, B, tb, n_tiles)
    return _forward_gather(u_idx, i_idx, params, B, tb, n_tiles)


if __name__ == "__main__":
    num_users, num_items, factor_num, batch = 32, 48, 32, 8

    key = jax.random.PRNGKey(0)
    k1, k2, k3, k4, k5, k6 = jax.random.split(key, 6)

    # nn.Embedding default init: N(0, 1)
    user_table = jax.random.normal(k1, (num_users, factor_num), jnp.float32)
    item_table = jax.random.normal(k2, (num_items, factor_num), jnp.float32)

    # nn.Linear(factor_num, 1) default init: U(-1/sqrt(F), 1/sqrt(F))
    bound = 1.0 / (factor_num ** 0.5)
    W = jax.random.uniform(k3, (1, factor_num), jnp.float32, -bound, bound)
    b = jax.random.uniform(k4, (1,), jnp.float32, -bound, bound)

    user_indices = jax.random.randint(k5, (batch,), 0, num_users, jnp.int32)
    item_indices = jax.random.randint(k6, (batch,), 0, num_items, jnp.int32)

    # Pure-JAX reference of the torch forward.
    u_emb = user_table[user_indices]
    i_emb = item_table[item_indices]
    ref = jax.nn.sigmoid((u_emb * i_emb) @ W.T + b)   # (B, 1)

    # 1) Small-vocab path: VMEM-resident tables + one-hot MXU gather (f32, exact).
    params = gmf_prepare_params(user_table, item_table, W, b)
    assert params["mode"] == "onehot"
    out = jax.block_until_ready(gmf_forward(user_indices, item_indices, params))
    assert out.shape == (batch, 1)
    assert jnp.allclose(out, ref, atol=1e-5, rtol=1e-5)

    # 2) Same path with bf16 gather matmuls (fast MXU path on v6e/v7x).
    params_bf16 = gmf_prepare_params(user_table, item_table, W, b,
                                     gather_dtype=jnp.bfloat16)
    out_bf16 = jax.block_until_ready(
        gmf_forward(user_indices, item_indices, params_bf16))
    assert jnp.allclose(out_bf16, ref, atol=2e-2)

    # 3) Large-vocab path (forced here): HBM tables + per-row DMA gather.
    params_dma = gmf_prepare_params(user_table, item_table, W, b,
                                    onehot_max_vocab=0)
    assert params_dma["mode"] == "gather"
    out_dma = jax.block_until_ready(
        gmf_forward(user_indices, item_indices, params_dma))
    assert jnp.allclose(out_dma, ref, atol=1e-5, rtol=1e-5)

    print("KERNEL_OK")
</pallas_src>

<mosaic_0001>
module attributes {stable_mosaic.version = 11 : i64} {
  func.func @_gmf_onehot_kernel(%arg0: i32, %arg1: memref<1x128xi32, #tpu.memory_space<vmem>>, %arg2: memref<1x128xi32, #tpu.memory_space<vmem>>, %arg3: memref<32x32xf32, #tpu.memory_space<vmem>>, %arg4: memref<32x48xf32, #tpu.memory_space<vmem>>, %arg5: memref<32x1xf32, #tpu.memory_space<vmem>>, %arg6: memref<1xf32, #tpu.memory_space<smem>>, %arg7: memref<1x128xf32, #tpu.memory_space<vmem>>) attributes {dimension_semantics = [#tpu.dimension_semantics<parallel>], iteration_bounds = array<i64: 1>, scalar_prefetch = 0 : i64, scratch_operands = 0 : i64, tpu.core_type = #tpu.core_type<tc>, window_params = [{transform_indices = @transform_0, window_bounds = array<i64: 1, 128>}, {transform_indices = @transform_1, window_bounds = array<i64: 1, 128>}, {pipeline_mode = #tpu.pipeline_mode<synchronous>, transform_indices = @transform_2, window_bounds = array<i64: 32, 32>}, {pipeline_mode = #tpu.pipeline_mode<synchronous>, transform_indices = @transform_3, window_bounds = array<i64: 32, 48>}, {pipeline_mode = #tpu.pipeline_mode<synchronous>, transform_indices = @transform_4, window_bounds = array<i64: 32, 1>}, {transform_indices = @transform_5, window_bounds = array<i64: 1>}, {transform_indices = @transform_6, window_bounds = array<i64: 1, 128>}]} {
    %c0 = arith.constant 0 : index
    %c0_0 = arith.constant 0 : index
    %0 = vector.load %arg1[%c0, %c0_0] : memref<1x128xi32, #tpu.memory_space<vmem>>, vector<1x128xi32>
    %c0_1 = arith.constant 0 : index
    %c0_2 = arith.constant 0 : index
    %1 = vector.load %arg2[%c0_1, %c0_2] : memref<1x128xi32, #tpu.memory_space<vmem>>, vector<1x128xi32>
    %2 = tpu.iota {dimensions = array<i32: 0>} : vector<32x128xi32>
    %3 = tpu.iota {dimensions = array<i32: 0>} : vector<48x128xi32>
    %4 = vector.broadcast %0 : vector<1x128xi32> to vector<32x128xi32>
    %5 = arith.cmpi eq, %2, %4 : vector<32x128xi32>
    %6 = arith.extui %5 : vector<32x128xi1> to vector<32x128xi32>
    %7 = arith.sitofp %6 : vector<32x128xi32> to vector<32x128xf32>
    %8 = vector.broadcast %1 : vector<1x128xi32> to vector<48x128xi32>
    %9 = arith.cmpi eq, %3, %8 : vector<48x128xi32>
    %10 = arith.extui %9 : vector<48x128xi1> to vector<48x128xi32>
    %11 = arith.sitofp %10 : vector<48x128xi32> to vector<48x128xf32>
    %c0_3 = arith.constant 0 : index
    %c0_4 = arith.constant 0 : index
    %12 = vector.load %arg3[%c0_3, %c0_4] : memref<32x32xf32, #tpu.memory_space<vmem>>, vector<32x32xf32>
    %cst = arith.constant dense<0.000000e+00> : vector<32x128xf32>
    %13 = tpu.matmul %12, %7, %cst {dimension_numbers = #tpu.dot_dimension_numbers<[1], [0], [0], [1], [0, 0, 1, 1], [], []>} : vector<32x32xf32>, vector<32x128xf32>, vector<32x128xf32> -> vector<32x128xf32>
    %c0_5 = arith.constant 0 : index
    %c0_6 = arith.constant 0 : index
    %14 = vector.load %arg4[%c0_5, %c0_6] : memref<32x48xf32, #tpu.memory_space<vmem>>, vector<32x48xf32>
    %cst_7 = arith.constant dense<0.000000e+00> : vector<32x128xf32>
    %15 = tpu.matmul %14, %11, %cst_7 {dimension_numbers = #tpu.dot_dimension_numbers<[1], [0], [0], [1], [0, 0, 1, 1], [], []>} : vector<32x48xf32>, vector<48x128xf32>, vector<32x128xf32> -> vector<32x128xf32>
    %16 = arith.mulf %13, %15 : vector<32x128xf32>
    %c0_8 = arith.constant 0 : index
    %c0_9 = arith.constant 0 : index
    %17 = vector.load %arg5[%c0_8, %c0_9] : memref<32x1xf32, #tpu.memory_space<vmem>>, vector<32x1xf32>
    %18 = vector.broadcast %17 : vector<32x1xf32> to vector<32x128xf32>
    %19 = arith.mulf %16, %18 : vector<32x128xf32>
    %cst_10 = arith.constant dense<0.000000e+00> : vector<128xf32>
    %20 = vector.multi_reduction <add>, %19, %cst_10 [0] : vector<32x128xf32> to vector<128xf32>
    %21 = vector.shape_cast %20 : vector<128xf32> to vector<1x128xf32>
    %c0_11 = arith.constant 0 : index
    %22 = memref.load %arg6[%c0_11] : memref<1xf32, #tpu.memory_space<smem>>
    %23 = vector.broadcast %22 : f32 to vector<1x128xf32>
    %24 = arith.addf %21, %23 : vector<1x128xf32>
    %25 = arith.negf %24 : vector<1x128xf32>
    %26 = math.exp %25 : vector<1x128xf32>
    %cst_12 = arith.constant 1.000000e+00 : f32
    %27 = vector.broadcast %cst_12 : f32 to vector<1x128xf32>
    %28 = arith.addf %27, %26 : vector<1x128xf32>
    %29 = arith.divf %27, %28 : vector<1x128xf32>
    %c0_13 = arith.constant 0 : index
    %c0_14 = arith.constant 0 : index
    %30 = vector.load %arg7[%c0_13, %c0_14] : memref<1x128xf32, #tpu.memory_space<vmem>>, vector<1x128xf32>
    tpu.vector_store %arg7[%c0_13, %c0_14], %29 {strides = array<i32>} : memref<1x128xf32, #tpu.memory_space<vmem>>, vector<1x128xf32>,
    return
  }
  func.func @transform_0(%arg0: i32) -> (i32, i32) {
    %c0_i32 = arith.constant 0 : i32
    %c0_i32_0 = arith.constant 0 : i32
    return %arg0, %c0_i32 : i32, i32
  }
  func.func @transform_1(%arg0: i32) -> (i32, i32) {
    %c0_i32 = arith.constant 0 : i32
    %c0_i32_0 = arith.constant 0 : i32
    return %arg0, %c0_i32 : i32, i32
  }
  func.func @transform_2(%arg0: i32) -> (i32, i32) {
    %c0_i32 = arith.constant 0 : i32
    %c0_i32_0 = arith.constant 0 : i32
    %c0_i32_1 = arith.constant 0 : i32
    return %c0_i32, %c0_i32_0 : i32, i32
  }
  func.func @transform_3(%arg0: i32) -> (i32, i32) {
    %c0_i32 = arith.constant 0 : i32
    %c0_i32_0 = arith.constant 0 : i32
    %c0_i32_1 = arith.constant 0 : i32
    return %c0_i32, %c0_i32_0 : i32, i32
  }
  func.func @transform_4(%arg0: i32) -> (i32, i32) {
    %c0_i32 = arith.constant 0 : i32
    %c0_i32_0 = arith.constant 0 : i32
    %c0_i32_1 = arith.constant 0 : i32
    return %c0_i32, %c0_i32_0 : i32, i32
  }
  func.func @transform_5(%arg0: i32) -> i32 {
    %c0_i32 = arith.constant 0 : i32
    %c0_i32_0 = arith.constant 0 : i32
    return %c0_i32 : i32
  }
  func.func @transform_6(%arg0: i32) -> (i32, i32) {
    %c0_i32 = arith.constant 0 : i32
    %c0_i32_0 = arith.constant 0 : i32
    return %arg0, %c0_i32 : i32, i32
  }
}

</mosaic_0001>

<llo_original>
// kernel: tpu_custom_call.1
$region0: #{tpu_custom_call.1}
  #allocation0 [shape = 'u32[]', space=smem, size = 0x4, offset = 0x4, fixed_abs, tag = 'smem constant byte address 0x4 - core index']
  #allocation1 [shape = 'u32[144,128]{1,0:T(1,128)}', space=vmem, size = 0x12000, scoped, tag = 'internal scratch']
  #allocation2 [shape = 'f32[1]{0:T(128)S(6)}', space=smem, size = 0x200, scoped, tag = 'scoped memory for tpu_custom_call.1']
  %s0 = inlined_call_operand.vmem [shape: s32[1,128], index: 0, kind: input, shape index: {}]
  %s1 = inlined_call_operand.vmem [shape: s32[1,128], index: 1, kind: input, shape index: {}]
  %s2 = inlined_call_operand.vmem [shape: f32[32,32], index: 2, kind: input, shape index: {}]
  %s3 = inlined_call_operand.hbm [shape: f32[32,48], index: 3, kind: input, shape index: {}]
  %s4 = inlined_call_operand.vmem [shape: f32[32,1], index: 4, kind: input, shape index: {}]
  %s5 = inlined_call_operand.<no memory space> [shape: f32[1], index: 5, kind: input, shape index: {}]
  %s6 = inlined_call_operand.hbm [shape: f32[1,128], index: 6, kind: output, shape index: {}]
  %s7 = sld [smem:[#allocation0]]
  $region38: #{tpu_custom_call.1} parent=0
    _
  %s9 = ssub.s32 1, %s7
  %s10 = scalar_select 0, %s9, %s7
  %11 = sst [smem:[#allocation2]] %s5
  $region1: #{tpu_custom_call.1} parent=0
    #allocation3 [shape = 'u8[16384]{0}', space=vmem, size = 0x4000, scoped, tag = 'input window, operand 3, single buffered']
    #allocation4 [shape = 's32[1]{0}', space=sflag, size = 0x4, scoped, tag = 'scoped memory for tpu_custom_call.1']
    #allocation5 [shape = 's32[1]{0}', space=sflag, size = 0x4, scoped, tag = 'scoped memory for tpu_custom_call.1']
    #allocation6 [shape = 'u8[512]{0}', space=vmem, size = 0x400, scoped, tag = 'output window, operand 0, single buffered']
    %12 = vsyncpa [#allocation4], 0
    %13 = vsyncpa [#allocation5], 0
    // Predicated region
    $region2: #{tpu_custom_call.1} parent=1 // pred_check
      _
    $region3: #{tpu_custom_call.1} parent=1 // pred_check_branch
      %15 = sbr.rel (0) target = $region5
    $region4: #{tpu_custom_call.1} parent=1 // pred_region
      _
    $region5: #{tpu_custom_call.1} parent=1 // pred_fallthru
      _
    // Predicated region
    $region6: #{tpu_custom_call.1} parent=1 // pred_check
      _
    $region7: #{tpu_custom_call.1} parent=1 // pred_check_branch
      %17 = sbr.rel (0) target = $region9
    $region8: #{tpu_custom_call.1} parent=1 // pred_region
      _
    $region9: #{tpu_custom_call.1} parent=1 // pred_fallthru
      _
    // Predicated region
    $region10: #{tpu_custom_call.1} parent=1 // pred_check
      _
    $region11: #{tpu_custom_call.1} parent=1 // pred_check_branch
      %19 = sbr.rel (0) target = $region13
    $region12: #{tpu_custom_call.1} parent=1 // pred_region
      _
    $region13: #{tpu_custom_call.1} parent=1 // pred_fallthru
      _
    // Predicated region
    $region14: #{tpu_custom_call.1} parent=1 // pred_check
      _
    $region15: #{tpu_custom_call.1} parent=1 // pred_check_branch
      %21 = sbr.rel (0) target = $region17
    $region16: #{tpu_custom_call.1} parent=1 // pred_region
      %s23 = ssub.s32 512, 512
      %24 = vsyncadd [#allocation4], %s23
      %s25 = sshll.u32 [#allocation3], 4
      %s26 = int_to_ptr.vmem [resolvable:$true] %s25
      %31 = dma.hbm_to_vmem [thread:$0]  %s3, 512, %s26, [#allocation4], 128, 128, 8
    $region17: #{tpu_custom_call.1} parent=1 // pred_fallthru
      _
    // Predicated region
    $region18: #{tpu_custom_call.1} parent=1 // pred_check
      _
    $region19: #{tpu_custom_call.1} parent=1 // pred_check_branch
      %33 = sbr.rel (0) target = $region21
    $region20: #{tpu_custom_call.1} parent=1 // pred_region
      _
    $region21: #{tpu_custom_call.1} parent=1 // pred_fallthru
      _
    // Predicated region
    $region22: #{tpu_custom_call.1} parent=1 // pred_check
      _
    $region23: #{tpu_custom_call.1} parent=1 // pred_check_branch
      %35 = sbr.rel (0) target = $region25
    $region24: #{tpu_custom_call.1} parent=1 // pred_region
      _
    $region25: #{tpu_custom_call.1} parent=1 // pred_fallthru
      _
    // Predicated region
    $region26: #{tpu_custom_call.1} parent=1 // pred_check
      _
    $region27: #{tpu_custom_call.1} parent=1 // pred_check_branch
      %37 = sbr.rel (0) target = $region29
    $region28: #{tpu_custom_call.1} parent=1 // pred_region
      %38 = dma.done [#allocation4], 512
    $region29: #{tpu_custom_call.1} parent=1 // pred_fallthru
      _
    %v39 = vld [vmem:[%s0] sm:$0x1]
    %v40 = vld [vmem:[%s1] sm:$0x1]
    %v41 = vlaneseq
    %v42 = vshrl.u32 %v41, 7
    %v43 = vadd.s32 %v42, 8
    %v44 = vadd.s32 %v42, 16
    %v45 = vadd.s32 %v42, 24
    %v46 = vadd.s32 %v42, 32
    %v47 = vadd.s32 %v42, 40
    %v48 = vlaneseq
    %v49 = vshrl.u32 %v48, 7
    %v50 = vsub.s32 0, %v49
    %v51 = vrot.slane %v39, %v50
    %vm52 = vcmp.eq.s32.totalorder %v42, %v51
    %vm53 = vcmp.eq.s32.totalorder %v43, %v51
    %vm54 = vcmp.eq.s32.totalorder %v44, %v51
    %vm55 = vcmp.eq.s32.totalorder %v45, %v51
    %v56 = vsel %vm52, 1, 0
    %v57 = vsel %vm53, 1, 0
    %v58 = vsel %vm54, 1, 0
    %v59 = vsel %vm55, 1, 0
    %v60 = vcvt.s32.f32 %v56
    %v61 = vcvt.s32.f32 %v57
    %v62 = vcvt.s32.f32 %v58
    %v63 = vcvt.s32.f32 %v59
    %v64 = vlaneseq
    %v65 = vshrl.u32 %v64, 7
    %v66 = vsub.s32 0, %v65
    %v67 = vrot.slane %v40, %v66
    %vm68 = vcmp.eq.s32.totalorder %v42, %v67
    %vm69 = vcmp.eq.s32.totalorder %v43, %v67
    %vm70 = vcmp.eq.s32.totalorder %v44, %v67
    %vm71 = vcmp.eq.s32.totalorder %v45, %v67
    %vm72 = vcmp.eq.s32.totalorder %v46, %v67
    %vm73 = vcmp.eq.s32.totalorder %v47, %v67
    %v74 = vsel %vm68, 1, 0
    %v75 = vsel %vm69, 1, 0
    %v76 = vsel %vm70, 1, 0
    %v77 = vsel %vm71, 1, 0
    %v78 = vsel %vm72, 1, 0
    %v79 = vsel %vm73, 1, 0
    %v80 = vcvt.s32.f32 %v74
    %v81 = vcvt.s32.f32 %v75
    %v82 = vcvt.s32.f32 %v76
    %v83 = vcvt.s32.f32 %v77
    %v84 = vcvt.s32.f32 %v78
    %v85 = vcvt.s32.f32 %v79
    %v86 = vld [vmem:[%s2] sm:$0xff]
    %v87 = vld [vmem:[%s2 + $0x8] sm:$0xff]
    %v88 = vld [vmem:[%s2 + $0x10] sm:$0xff]
    %v89 = vld [vmem:[%s2 + $0x18] sm:$0xff]
    %vm90 = vcmask 261120
    %v92 = vsel %vm90, %v86, 0
    %v95 = vsel %vm90, %v87, 0
    %v98 = vsel %vm90, %v88, 0
    %v101 = vsel %vm90, %v89, 0
    %103 = vmatprep.subr.mxu0 0.0
    %104 = vmatpush1.msra.mxu0 %v60
    %105 = vmatprep.subr.mxu0 0.0
    %106 = vmatpush1.msra.mxu0 %v61
    %107 = vmatprep.subr.mxu0 0.0
    %108 = vmatpush1.msra.mxu0 %v62
    %109 = vmatprep.subr.mxu0 0.0
    %110 = vmatpush1.msra.mxu0 %v63
    %111 = vmatprep.subr.mxu0 0.0
    %112 = vmatpush1.msra.mxu0 0.0
    %113 = vmatprep.subr.mxu0 0.0
    %114 = vmatpush1.msra.mxu0 0.0
    %115 = vmatprep.subr.mxu0 0.0
    %116 = vmatpush1.msra.mxu0 0.0
    %117 = vmatprep.subr.mxu0 0.0
    %118 = vmatpush1.msra.mxu0 0.0
    %119 = vmatprep.subr.mxu0 0.0
    %120 = vmatpush1.msra.mxu0 0.0
    %121 = vmatprep.subr.mxu0 0.0
    %122 = vmatpush1.msra.mxu0 0.0
    %123 = vmatprep.subr.mxu0 0.0
    %124 = vmatpush1.msra.mxu0 0.0
    %125 = vmatprep.subr.mxu0 0.0
    %126 = vmatpush1.msra.mxu0 0.0
    %127 = vmatprep.subr.mxu0 0.0
    %128 = vmatpush1.msra.mxu0 0.0
    %129 = vmatprep.subr.mxu0 0.0
    %130 = vmatpush1.msra.mxu0 0.0
    %131 = vmatprep.subr.mxu0 0.0
    %132 = vmatpush1.msra.mxu0 0.0
    %133 = vmatprep.subr.mxu0 0.0
    %134 = vmatpush1.msra.mxu0 0.0
    %135 = vmatprep.subr.mxu0 0.0
    %136 = vmatpush1.msra.mxu0 0.0
    %137 = vmatprep.subr.mxu0 0.0
    %138 = vmatpush1.msra.mxu0 0.0
    %139 = vmatprep.subr.mxu0 0.0
    %140 = vmatpush1.msra.mxu0 0.0
    %141 = vmatprep.subr.mxu0 0.0
    %142 = vmatpush1.msra.mxu0 0.0
    %143 = vmatprep.subr.mxu0 0.0
    %144 = vmatpush1.msra.mxu0 0.0
    %145 = vmatprep.subr.mxu0 0.0
    %146 = vmatpush1.msra.mxu0 0.0
    %147 = vmatprep.subr.mxu0 0.0
    %148 = vmatpush1.msra.mxu0 0.0
    %149 = vmatprep.subr.mxu0 0.0
    %150 = vmatpush1.msra.mxu0 0.0
    %151 = vmatprep.subr.mxu0 0.0
    %152 = vmatpush1.msra.mxu0 0.0
    %153 = vmatprep.subr.mxu0 0.0
    %154 = vmatpush1.msra.mxu0 0.0
    %155 = vmatprep.subr.mxu0 0.0
    %156 = vmatpush1.msra.mxu0 0.0
    %157 = vmatprep.subr.mxu0 0.0
    %158 = vmatpush1.msra.mxu0 0.0
    %159 = vmatprep.subr.mxu0 0.0
    %160 = vmatpush1.msra.mxu0 0.0
    %161 = vmatprep.subr.mxu0 0.0
    %162 = vmatpush1.msra.mxu0 0.0
    %163 = vmatprep.subr.mxu0 0.0
    %164 = vmatpush1.msra.mxu0 0.0
    %165 = vmatprep.subr.mxu0 0.0
    %166 = vmatpush1.msra.mxu0 0.0
    %167 = vmatprep.mubr.f32.mxu0 0.0
    %168 = vmatmul.mubr.f32.gmra.mrb[0].mxu0 %v92
    %v169 = vpop.f32.mrb[0].mxu0
    %v170 = vadd.f32 0.0, %v169
    %v171 = vpop.f32.mrb[0].mxu0
    %172 = vmatprep.mubr.f32.mxu0 0.0
    %173 = vmatmul.mubr.f32.gmra.mrb[0].mxu0 %v95
    %v174 = vpop.f32.mrb[0].mxu0
    %v175 = vadd.f32 0.0, %v174
    %v176 = vpop.f32.mrb[0].mxu0
    %177 = vmatprep.mubr.f32.mxu0 0.0
    %178 = vmatmul.mubr.f32.gmra.mrb[0].mxu0 %v98
    %v179 = vpop.f32.mrb[0].mxu0
    %v180 = vadd.f32 0.0, %v179
    %v181 = vpop.f32.mrb[0].mxu0
    %182 = vmatprep.mubr.f32.mxu0 0.0
    %183 = vmatmul.mubr.f32.gmra.mrb[0].mxu0 %v101
    %v184 = vpop.f32.mrb[0].mxu0
    %v185 = vadd.f32 0.0, %v184
    %v186 = vpop.f32.mrb[0].mxu0
    %187 = vdwg.mxu0
    %v188 = vld [vmem:[#allocation3] sm:$0xff]
    %v189 = vld [vmem:[#allocation3 + $0x8] sm:$0xff]
    %v190 = vld [vmem:[#allocation3 + $0x10] sm:$0xff]
    %v191 = vld [vmem:[#allocation3 + $0x18] sm:$0xff]
    %vm192 = vcmask 392192
    %v194 = vsel %vm192, %v188, 0
    %v197 = vsel %vm192, %v189, 0
    %v200 = vsel %vm192, %v190, 0
    %v203 = vsel %vm192, %v191, 0
    %205 = vmatprep.subr.mxu0 0.0
    %206 = vmatpush1.msra.mxu0 %v80
    %207 = vmatprep.subr.mxu0 0.0
    %208 = vmatpush1.msra.mxu0 %v81
    %209 = vmatprep.subr.mxu0 0.0
    %210 = vmatpush1.msra.mxu0 %v82
    %211 = vmatprep.subr.mxu0 0.0
    %212 = vmatpush1.msra.mxu0 %v83
    %213 = vmatprep.subr.mxu0 0.0
    %214 = vmatpush1.msra.mxu0 %v84
    %215 = vmatprep.subr.mxu0 0.0
    %216 = vmatpush1.msra.mxu0 %v85
    %217 = vmatprep.subr.mxu0 0.0
    %218 = vmatpush1.msra.mxu0 0.0
    %219 = vmatprep.subr.mxu0 0.0
    %220 = vmatpush1.msra.mxu0 0.0
    %221 = vmatprep.subr.mxu0 0.0
    %222 = vmatpush1.msra.mxu0 0.0
    %223 = vmatprep.subr.mxu0 0.0
    %224 = vmatpush1.msra.mxu0 0.0
    %225 = vmatprep.subr.mxu0 0.0
    %226 = vmatpush1.msra.mxu0 0.0
    %227 = vmatprep.subr.mxu0 0.0
    %228 = vmatpush1.msra.mxu0 0.0
    %229 = vmatprep.subr.mxu0 0.0
    %230 = vmatpush1.msra.mxu0 0.0
    %231 = vmatprep.subr.mxu0 0.0
    %232 = vmatpush1.msra.mxu0 0.0
    %233 = vmatprep.subr.mxu0 0.0
    %234 = vmatpush1.msra.mxu0 0.0
    %235 = vmatprep.subr.mxu0 0.0
    %236 = vmatpush1.msra.mxu0 0.0
    %237 = vmatprep.subr.mxu0 0.0
    %238 = vmatpush1.msra.mxu0 0.0
    %239 = vmatprep.subr.mxu0 0.0
    %240 = vmatpush1.msra.mxu0 0.0
    %241 = vmatprep.subr.mxu0 0.0
    %242 = vmatpush1.msra.mxu0 0.0
    %243 = vmatprep.subr.mxu0 0.0
    %244 = vmatpush1.msra.mxu0 0.0
    %245 = vmatprep.subr.mxu0 0.0
    %246 = vmatpush1.msra.mxu0 0.0
    %247 = vmatprep.subr.mxu0 0.0
    %248 = vmatpush1.msra.mxu0 0.0
    %249 = vmatprep.subr.mxu0 0.0
    %250 = vmatpush1.msra.mxu0 0.0
    %251 = vmatprep.subr.mxu0 0.0
    %252 = vmatpush1.msra.mxu0 0.0
    %253 = vmatprep.subr.mxu0 0.0
    %254 = vmatpush1.msra.mxu0 0.0
    %255 = vmatprep.subr.mxu0 0.0
    %256 = vmatpush1.msra.mxu0 0.0
    %257 = vmatprep.subr.mxu0 0.0
    %258 = vmatpush1.msra.mxu0 0.0
    %259 = vmatprep.subr.mxu0 0.0
    %260 = vmatpush1.msra.mxu0 0.0
    %261 = vmatprep.subr.mxu0 0.0
    %262 = vmatpush1.msra.mxu0 0.0
    %263 = vmatprep.subr.mxu0 0.0
    %264 = vmatpush1.msra.mxu0 0.0
    %265 = vmatprep.subr.mxu0 0.0
    %266 = vmatpush1.msra.mxu0 0.0
    %267 = vmatprep.subr.mxu0 0.0
    %268 = vmatpush1.msra.mxu0 0.0
    %269 = vmatprep.mubr.f32.mxu0 0.0
    %270 = vmatmul.mubr.f32.gmra.mrb[0].mxu0 %v194
    %v271 = vpop.f32.mrb[0].mxu0
    %v272 = vadd.f32 0.0, %v271
    %v273 = vpop.f32.mrb[0].mxu0
    %274 = vmatprep.mubr.f32.mxu0 0.0
    %275 = vmatmul.mubr.f32.gmra.mrb[0].mxu0 %v197
    %v276 = vpop.f32.mrb[0].mxu0
    %v277 = vadd.f32 0.0, %v276
    %v278 = vpop.f32.mrb[0].mxu0
    %279 = vmatprep.mubr.f32.mxu0 0.0
    %280 = vmatmul.mubr.f32.gmra.mrb[0].mxu0 %v200
    %v281 = vpop.f32.mrb[0].mxu0
    %v282 = vadd.f32 0.0, %v281
    %v283 = vpop.f32.mrb[0].mxu0
    %284 = vmatprep.mubr.f32.mxu0 0.0
    %285 = vmatmul.mubr.f32.gmra.mrb[0].mxu0 %v203
    %v286 = vpop.f32.mrb[0].mxu0
    %v287 = vadd.f32 0.0, %v286
    %v288 = vpop.f32.mrb[0].mxu0
    %289 = vdwg.mxu0
    %v290 = vmul.f32 %v170, %v272
    %v291 = vmul.f32 %v175, %v277
    %v292 = vmul.f32 %v180, %v282
    %v293 = vmul.f32 %v185, %v287
    %v294 = vld [vmem:[%s4] sm:$0xff]
    %v295 = vld [vmem:[%s4 + $0x8] sm:$0xff]
    %v296 = vld [vmem:[%s4 + $0x10] sm:$0xff]
    %v297 = vld [vmem:[%s4 + $0x18] sm:$0xff]
    %299 = vset.pattern.permute.xlu0 0
    %300 = vperm.xlu0 %299, %v294
    %v301 = vpop.permute.xlu0 %300
    %304 = vset.pattern.permute.xlu0 0
    %305 = vperm.xlu0 %304, %v295
    %v306 = vpop.permute.xlu0 %305
    %309 = vset.pattern.permute.xlu0 0
    %310 = vperm.xlu0 %309, %v296
    %v311 = vpop.permute.xlu0 %310
    %314 = vset.pattern.permute.xlu0 0
    %315 = vperm.xlu0 %314, %v297
    %v316 = vpop.permute.xlu0 %315
    %v318 = vmul.f32 %v290, %v301
    %v319 = vmul.f32 %v291, %v306
    %v320 = vmul.f32 %v292, %v311
    %v321 = vmul.f32 %v293, %v316
    %v322 = vadd.f32 %v318, %v319
    %v323 = vadd.f32 %v322, %v320
    %v324 = vadd.f32 %v323, %v321
    %v325 = vrot.slane %v324, 4
    %v326 = vadd.f32 %v324, %v325
    %v327 = vrot.slane %v326, 2
    %v328 = vadd.f32 %v326, %v327
    %v329 = vrot.slane %v328, 1
    %v330 = vadd.f32 %v328, %v329
    %s331 = sld [smem:[#allocation2]]
    %v332 = vstv %s331
    %v333 = vadd.f32 %v330, %v332
    %v334 = vxor.u32 %v333, 2147483648
    %v335 = vmul.f32 %v334, 1.442695
    %v336 = vpow.pop %v335
    %v337 = vadd.f32 %v336, 1.0
    %v338 = vrcp.pop %v337
    %v339 = vmul.f32 1.0, %v338
    %340 = vst [vmem:[#allocation6] sm:$0x1] %v339
    // Predicated region
    $region30: #{tpu_custom_call.1} parent=1 // pred_check
      _
    $region31: #{tpu_custom_call.1} parent=1 // pred_check_branch
      %342 = sbr.rel (0) target = $region33
    $region32: #{tpu_custom_call.1} parent=1 // pred_region
      %s344 = ssub.s32 16, 16
      %345 = vsyncadd [#allocation5], %s344
      %s347 = sshll.u32 [#allocation6], 4
      %s348 = int_to_ptr.vmem [resolvable:$true] %s347
      %350 = dma.vmem_to_hbm [thread:$0]  %s348, 16, %s6, [#allocation5]
    $region33: #{tpu_custom_call.1} parent=1 // pred_fallthru
      _
    // Predicated region
    $region34: #{tpu_custom_call.1} parent=1 // pred_check
      _
    $region35: #{tpu_custom_call.1} parent=1 // pred_check_branch
      %352 = sbr.rel (0) target = $region37
    $region36: #{tpu_custom_call.1} parent=1 // pred_region
      %353 = dma.done [#allocation5], 16
    $region37: #{tpu_custom_call.1} parent=1 // pred_fallthru
      _
    %354 = vsyncpa [#allocation4], 1
    %355 = vsyncpa [#allocation5], 1

</llo_original>
